<compile_context>
chip_gen: v5e
topology: v5e:2x2
jax: 0.10.0
libtpu: 0.0.40
codegen_flags: <defaults>
</compile_context>

<pallas_src>
import math
import numpy as np
import jax
import jax.numpy as jnp
from jax.experimental import pallas as pl
from jax.experimental.pallas import tpu as pltpu

ACT_GAIN = math.sqrt(2.0)   # bias_act def_gain for 'relu'


def _to_rgb_kernel(xcol_ref, w3_ref, w1_ref, b1_ref, out_ref):
    """Fused: (modulated 3x3 conv + noise + bias) -> relu*sqrt(2)
              -> (modulated 1x1 to-RGB conv + bias).

    xcol_ref : (K, HW)           im2col of the padded input; per-batch blocks
                                 stacked along K; two extra rows carry the
                                 all-ones / noise maps so bias + noise come
                                 out of the same matmul.
    w3_ref   : (B*C_in, K)       block-diagonal modulated+demodulated 3x3
                                 weight, plus bias / noise columns.
    w1_ref   : (B*C_out, B*C_in) block-diagonal modulated 1x1 to-RGB weight.
    b1_ref   : (B*C_out, 1)      to-RGB bias per (batch, channel) row.
    out_ref  : (B*C_out, HW)     lane-dense output; reshapes to NCHW for free.
    """
    f32 = jnp.float32
    h = jnp.dot(w3_ref[...], xcol_ref[...], preferred_element_type=f32)
    h = jnp.maximum(h, 0.0) * ACT_GAIN                       # relu * def_gain
    y = jnp.dot(w1_ref[...], h, preferred_element_type=f32) + b1_ref[...]
    out_ref[...] = y.astype(out_ref.dtype)


def to_rgb_block_forward(x_nchw, latent1, params):
    """x_nchw: (B, C_in, H, W) f32, latent1: (B, 2, L) f32 -> (B, C_out, H, W)."""
    B, C_in, H, W = x_nchw.shape
    L = latent1.shape[-1]
    C_out = params["w_rgb"].shape[0]
    HW = H * W
    f32 = jnp.float32
    hi = jax.lax.Precision.HIGHEST

    fc_gain = 1.0 / math.sqrt(L)        # FullyConnectedLayer.weight_gain (lr_mult=1)
    rgb_gain = 1.0 / math.sqrt(C_in)    # ToRGBBlock.weight_gain (1x1 kernel)

    x = x_nchw.astype(f32)
    lat0 = latent1[:, 0, :].astype(f32)                      # conv0 affine input
    lat1 = latent1[:, 1, :].astype(f32)                      # to-RGB affine input

    # ---------------- wrapper-side (tiny, weight/latent-only) math ----------------
    s0 = jnp.dot(lat0, (params["a0_w"].astype(f32) * fc_gain).T, precision=hi) \
        + params["a0_b"].astype(f32)                         # (B, C_in)
    s1 = (jnp.dot(lat1, (params["a1_w"].astype(f32) * fc_gain).T, precision=hi)
          + params["a1_b"].astype(f32)) * rgb_gain           # (B, C_in)

    # modulate + demodulate the 3x3 weight per batch element (fused_modconv path)
    w0 = params["w_conv0"].astype(f32)                       # (O=C_in, I=C_in, 3, 3)
    wmod = w0[None] * s0[:, None, :, None, None]             # (B, O, I, 3, 3)
    dcoef = jax.lax.rsqrt(jnp.sum(wmod * wmod, axis=(2, 3, 4)) + 1e-8)   # (B, O)
    wdem = wmod * dcoef[:, :, None, None, None]              # (B, O, I, 3, 3)
    # -> (B, O, 9*C_in) with k = (kh*3 + kw)*C_in + i
    w3 = jnp.transpose(wdem, (0, 1, 3, 4, 2)).reshape(B, C_in, 9 * C_in)

    KB = ((9 * C_in + 7) // 8) * 8      # per-batch K block, 8-sublane aligned
    EXTRA = 8                           # extra K block: [ones, noise, 0, ...]
    K = B * KB + EXTRA

    # im2col of the zero-padded input: rows (tap, ci) per batch block, HW on lanes
    x_pad = jnp.pad(x, ((0, 0), (0, 0), (1, 1), (1, 1)))     # (B, C_in, H+2, W+2)
    taps = [x_pad[:, :, dy:dy + H, dx:dx + W].reshape(B, C_in, HW)
            for dy in range(3) for dx in range(3)]
    xcol = jnp.stack(taps, axis=1).reshape(B, 9 * C_in, HW)  # (B, 9*C_in, HW)
    xcol = jnp.pad(xcol, ((0, 0), (0, KB - 9 * C_in), (0, 0))).reshape(B * KB, HW)
    ones_row = jnp.ones((1, HW), f32)
    noise_row = (params["noise_const"].astype(f32).reshape(1, HW)
                 * params["noise_strength"])                 # traced: no recompile
    xcol_big = jnp.concatenate(
        [xcol, ones_row, noise_row, jnp.zeros((EXTRA - 2, HW), f32)], axis=0)  # (K, HW)

    # block-diagonal 3x3 weight + bias/noise columns
    b0_tiled = jnp.tile(params["b_conv0"].astype(f32), B)    # (B*C_in,)
    w3p = jnp.pad(w3, ((0, 0), (0, 0), (0, KB - 9 * C_in)))  # (B, C_in, KB)
    w3_big = jnp.zeros((B * C_in, K), f32)
    for b in range(B):
        w3_big = w3_big.at[b * C_in:(b + 1) * C_in, b * KB:(b + 1) * KB].set(w3p[b])
    w3_big = w3_big.at[:, B * KB].set(b0_tiled)              # * ones row  -> +bias
    w3_big = w3_big.at[:, B * KB + 1].set(1.0)               # * noise row -> +noise

    # block-diagonal modulated 1x1 to-RGB weight (no demod) + bias column
    w1 = params["w_rgb"][:, :, 0, 0].astype(f32)             # (C_out, C_in)
    w1m = w1[None] * s1[:, None, :]                          # (B, C_out, C_in)
    w1_big = jnp.zeros((B * C_out, B * C_in), f32)
    for b in range(B):
        w1_big = w1_big.at[b * C_out:(b + 1) * C_out,
                           b * C_in:(b + 1) * C_in].set(w1m[b])
    b1_col = jnp.tile(params["b_rgb"].astype(f32), B).reshape(B * C_out, 1)

    # ------------- fused Pallas kernel: whole batch in ONE grid step -------------
    out_flat = pl.pallas_call(
        _to_rgb_kernel,
        out_shape=jax.ShapeDtypeStruct((B * C_out, HW), f32),
        grid=(1,),
        in_specs=[
            pl.BlockSpec((K, HW), lambda i: (0, 0)),                  # xcol
            pl.BlockSpec((B * C_in, K), lambda i: (0, 0)),            # 3x3 weight
            pl.BlockSpec((B * C_out, B * C_in), lambda i: (0, 0)),    # 1x1 weight
            pl.BlockSpec((B * C_out, 1), lambda i: (0, 0)),           # rgb bias
        ],
        out_specs=pl.BlockSpec((B * C_out, HW), lambda i: (0, 0)),
        compiler_params=pltpu.CompilerParams(dimension_semantics=("arbitrary",)),
    )(xcol_big, w3_big, w1_big, b1_col)

    return out_flat.reshape(B, C_out, H, W)                  # already NCHW order


def reference_forward(x, latent1, params):
    """Pure-JAX reference mirroring the PyTorch module (fp32 path)."""
    B, C_in, H, W = x.shape
    L = latent1.shape[-1]
    fc_gain = 1.0 / math.sqrt(L)
    rgb_gain = 1.0 / math.sqrt(C_in)
    hi = jax.lax.Precision.HIGHEST

    lat0, lat1 = latent1[:, 0, :], latent1[:, 1, :]
    s0 = jnp.dot(lat0, (params["a0_w"] * fc_gain).T, precision=hi) + params["a0_b"]
    w = params["w_conv0"][None] * s0[:, None, :, None, None]            # (B,O,I,3,3)
    d = jax.lax.rsqrt(jnp.sum(w * w, axis=(2, 3, 4)) + 1e-8)            # (B,O)
    w = w * d[:, :, None, None, None]

    def conv_b(xb, wb):
        return jax.lax.conv_general_dilated(
            xb[None], wb, (1, 1), ((1, 1), (1, 1)),
            dimension_numbers=("NCHW", "OIHW", "NCHW"), precision=hi)[0]

    h = jax.vmap(conv_b)(x, w)
    h = h + (params["noise_const"] * params["noise_strength"])[None, None]
    h = jnp.maximum(h + params["b_conv0"][None, :, None, None], 0.0) * math.sqrt(2.0)

    s1 = (jnp.dot(lat1, (params["a1_w"] * fc_gain).T, precision=hi)
          + params["a1_b"]) * rgb_gain
    w1 = params["w_rgb"][:, :, 0, 0]                                    # (O, I)
    w1m = w1[None] * s1[:, None, :]                                     # (B, O, I)
    y = jnp.einsum("bchw,boc->bohw", h, w1m, precision=hi)
    return y + params["b_rgb"][None, :, None, None]


if __name__ == "__main__":
    B, C_in, C_out, L, R = 2, 4, 3, 8, 16

    key = jax.random.PRNGKey(0)
    k = jax.random.split(key, 10)
    params = {
        "a0_w": jax.random.normal(k[0], (C_in, L), jnp.float32),        # conv0 affine
        "a0_b": jnp.ones((C_in,), jnp.float32),                         # bias_init=1
        "w_conv0": jax.random.normal(k[1], (C_in, C_in, 3, 3), jnp.float32),
        "b_conv0": 0.1 * jax.random.normal(k[2], (C_in,), jnp.float32),
        "noise_const": jax.random.normal(k[3], (R, R), jnp.float32),
        "noise_strength": jnp.float32(0.2),
        "a1_w": jax.random.normal(k[4], (C_in, L), jnp.float32),        # to-RGB affine
        "a1_b": jnp.ones((C_in,), jnp.float32),                         # bias_init=1
        "w_rgb": jax.random.normal(k[5], (C_out, C_in, 1, 1), jnp.float32),
        "b_rgb": 0.1 * jax.random.normal(k[6], (C_out,), jnp.float32),
    }

    x = jax.random.normal(k[7], (B, C_in, R, R), jnp.float32)           # NCHW
    latent1 = jax.random.normal(k[8], (B, 2, L), jnp.float32)           # (B, 2, L)

    fwd = jax.jit(to_rgb_block_forward)
    out = jax.block_until_ready(fwd(x, latent1, params))

    ref = reference_forward(x, latent1, params)
    assert out.shape == (B, C_out, R, R), out.shape
    err = float(np.max(np.abs(np.asarray(out) - np.asarray(ref))))
    assert np.allclose(np.asarray(out), np.asarray(ref), rtol=2e-2, atol=2e-2), err

    print("KERNEL_OK")
</pallas_src>

<mosaic_0001>
module attributes {stable_mosaic.version = 11 : i64} {
  func.func @_to_rgb_kernel(%arg0: i32, %arg1: memref<88x256xf32, #tpu.memory_space<vmem>>, %arg2: memref<8x88xf32, #tpu.memory_space<vmem>>, %arg3: memref<6x8xf32, #tpu.memory_space<vmem>>, %arg4: memref<6x1xf32, #tpu.memory_space<vmem>>, %arg5: memref<6x256xf32, #tpu.memory_space<vmem>>) attributes {dimension_semantics = [#tpu.dimension_semantics<arbitrary>], iteration_bounds = array<i64: 1>, scalar_prefetch = 0 : i64, scratch_operands = 0 : i64, tpu.core_type = #tpu.core_type<tc>, window_params = [{pipeline_mode = #tpu.pipeline_mode<synchronous>, transform_indices = @transform_0, window_bounds = array<i64: 88, 256>}, {pipeline_mode = #tpu.pipeline_mode<synchronous>, transform_indices = @transform_1, window_bounds = array<i64: 8, 88>}, {pipeline_mode = #tpu.pipeline_mode<synchronous>, transform_indices = @transform_2, window_bounds = array<i64: 6, 8>}, {pipeline_mode = #tpu.pipeline_mode<synchronous>, transform_indices = @transform_3, window_bounds = array<i64: 6, 1>}, {pipeline_mode = #tpu.pipeline_mode<synchronous>, transform_indices = @transform_4, window_bounds = array<i64: 6, 256>}]} {
    %c0 = arith.constant 0 : index
    %c0_0 = arith.constant 0 : index
    %0 = vector.load %arg2[%c0, %c0_0] : memref<8x88xf32, #tpu.memory_space<vmem>>, vector<8x88xf32>
    %c0_1 = arith.constant 0 : index
    %c0_2 = arith.constant 0 : index
    %1 = vector.load %arg1[%c0_1, %c0_2] : memref<88x256xf32, #tpu.memory_space<vmem>>, vector<88x256xf32>
    %cst = arith.constant dense<0.000000e+00> : vector<8x256xf32>
    %2 = tpu.matmul %0, %1, %cst {dimension_numbers = #tpu.dot_dimension_numbers<[1], [0], [0], [1], [0, 0, 1, 1], [], []>} : vector<8x88xf32>, vector<88x256xf32>, vector<8x256xf32> -> vector<8x256xf32>
    %cst_3 = arith.constant 0.000000e+00 : f32
    %3 = vector.broadcast %cst_3 : f32 to vector<8x256xf32>
    %4 = arith.maximumf %2, %3 : vector<8x256xf32>
    %cst_4 = arith.constant 1.41421354 : f32
    %5 = vector.broadcast %cst_4 : f32 to vector<8x256xf32>
    %6 = arith.mulf %4, %5 : vector<8x256xf32>
    %c0_5 = arith.constant 0 : index
    %c0_6 = arith.constant 0 : index
    %7 = vector.load %arg3[%c0_5, %c0_6] : memref<6x8xf32, #tpu.memory_space<vmem>>, vector<6x8xf32>
    %cst_7 = arith.constant dense<0.000000e+00> : vector<6x256xf32>
    %8 = tpu.matmul %7, %6, %cst_7 {dimension_numbers = #tpu.dot_dimension_numbers<[1], [0], [0], [1], [0, 0, 1, 1], [], []>} : vector<6x8xf32>, vector<8x256xf32>, vector<6x256xf32> -> vector<6x256xf32>
    %c0_8 = arith.constant 0 : index
    %c0_9 = arith.constant 0 : index
    %9 = vector.load %arg4[%c0_8, %c0_9] : memref<6x1xf32, #tpu.memory_space<vmem>>, vector<6x1xf32>
    %10 = vector.broadcast %9 : vector<6x1xf32> to vector<6x256xf32>
    %11 = arith.addf %8, %10 : vector<6x256xf32>
    %c0_10 = arith.constant 0 : index
    %c0_11 = arith.constant 0 : index
    %12 = vector.load %arg5[%c0_10, %c0_11] : memref<6x256xf32, #tpu.memory_space<vmem>>, vector<6x256xf32>
    tpu.vector_store %arg5[%c0_10, %c0_11], %11 {strides = array<i32>} : memref<6x256xf32, #tpu.memory_space<vmem>>, vector<6x256xf32>,
    return
  }
  func.func @transform_0(%arg0: i32) -> (i32, i32) {
    %c0_i32 = arith.constant 0 : i32
    %c0_i32_0 = arith.constant 0 : i32
    %c0_i32_1 = arith.constant 0 : i32
    return %c0_i32, %c0_i32_0 : i32, i32
  }
  func.func @transform_1(%arg0: i32) -> (i32, i32) {
    %c0_i32 = arith.constant 0 : i32
    %c0_i32_0 = arith.constant 0 : i32
    %c0_i32_1 = arith.constant 0 : i32
    return %c0_i32, %c0_i32_0 : i32, i32
  }
  func.func @transform_2(%arg0: i32) -> (i32, i32) {
    %c0_i32 = arith.constant 0 : i32
    %c0_i32_0 = arith.constant 0 : i32
    %c0_i32_1 = arith.constant 0 : i32
    return %c0_i32, %c0_i32_0 : i32, i32
  }
  func.func @transform_3(%arg0: i32) -> (i32, i32) {
    %c0_i32 = arith.constant 0 : i32
    %c0_i32_0 = arith.constant 0 : i32
    %c0_i32_1 = arith.constant 0 : i32
    return %c0_i32, %c0_i32_0 : i32, i32
  }
  func.func @transform_4(%arg0: i32) -> (i32, i32) {
    %c0_i32 = arith.constant 0 : i32
    %c0_i32_0 = arith.constant 0 : i32
    %c0_i32_1 = arith.constant 0 : i32
    return %c0_i32, %c0_i32_0 : i32, i32
  }
}

</mosaic_0001>

<llo_original>
// kernel: tile.13
$region0: #{tile.13}
  #allocation0 [shape = 's32[1]{0}', space=sflag, size = 0x4, scoped, tag = 'scoped memory for tile.13']
  %s0 = inlined_call_operand.vmem [shape: f32[4], index: 0, kind: input, shape index: {}]
  %s1 = inlined_call_operand.vmem [shape: f32[2,4], index: 1, kind: output, shape index: {}]
  // Predicated region
  $region2: #{tile.13} parent=0 // pred_check
    _
  $region3: #{tile.13} parent=0 // pred_check_branch
    %3 = sbr.rel (0) target = $region5
  $region4: #{tile.13} parent=0 // pred_region
    _
  $region5: #{tile.13} parent=0 // pred_fallthru
    _
  %v4 = vld [vmem:[%s0] ss:$0 sm:$0xff]
  %5 = vst [vmem:[%s1] sm:$0x3] %v4

// kernel: tile.18
$region0: #{tile.18}
  #allocation0 [shape = 's32[1]{0}', space=sflag, size = 0x4, scoped, tag = 'scoped memory for tile.18']
  %s0 = inlined_call_operand.vmem [shape: f32[3], index: 0, kind: input, shape index: {}]
  %s1 = inlined_call_operand.vmem [shape: f32[2,3], index: 1, kind: output, shape index: {}]
  // Predicated region
  $region2: #{tile.18} parent=0 // pred_check
    _
  $region3: #{tile.18} parent=0 // pred_check_branch
    %3 = sbr.rel (0) target = $region5
  $region4: #{tile.18} parent=0 // pred_region
    _
  $region5: #{tile.18} parent=0 // pred_fallthru
    _
  %v4 = vld [vmem:[%s0] ss:$0 sm:$0xff]
  %5 = vst [vmem:[%s1] sm:$0x3] %v4

// kernel: tile.0
$region0: #{tile.0}
  %s0 = inlined_call_operand.vmem [shape: f32[2,3], index: 0, kind: input, shape index: {}]
  %s1 = inlined_call_operand.vmem [shape: f32[6,1], index: 1, kind: output, shape index: {}]
  $region1: #{tile.0} parent=0
    #allocation0 [shape = 'u8[4096]{0}', space=vmem, size = 0x1000, scoped, tag = 'scoped mem for input reshape']
    %s3 = ssub.s32 4, 1
    %v4 = vld [vmem:[%s0] sm:%s3]
    %5 = vst [vmem:[#allocation0] sm:%s3] %v4
    %v6 = vld [vmem:[#allocation0] sm:$0x3]
    %vm7 = vcmask 7168
    %8 = vst.msk [vmem:[%s1] ss:$3 sm:$0x3] %vm7, %v6
    %v9 = vld [vmem:[#allocation0] sm:$0x3]
    %10 = vrot.lane.b32.xlu0 %v9, 127
    %v11 = vpop.permute.xlu0 %10
    %vm12 = vcmask 7168
    %s13 = scalar_lea.vmem %s1, 1
    %14 = vst.msk [vmem:[%s13] ss:$3 sm:$0x3] %vm12, %v11
    %v15 = vld [vmem:[#allocation0] sm:$0x3]
    %16 = vrot.lane.b32.xlu0 %v15, 126
    %v17 = vpop.permute.xlu0 %16
    %vm18 = vcmask 7168
    %s19 = scalar_lea.vmem %s1, 2
    %20 = vst.msk [vmem:[%s19] ss:$3 sm:$0x3] %vm18, %v17

// kernel: to_rgb_block_forward.1
$region0: #{to_rgb_block_forward.1}
  #allocation0 [shape = 'u32[]', space=smem, size = 0x4, offset = 0x4, fixed_abs, tag = 'smem constant byte address 0x4 - core index']
  #allocation1 [shape = 'u32[72,128]{1,0:T(1,128)}', space=vmem, size = 0x9000, scoped, tag = 'internal scratch']
  %s0 = inlined_call_operand.vmem [shape: f32[88,256], index: 0, kind: input, shape index: {}]
  %s1 = inlined_call_operand.vmem [shape: f32[8,88], index: 1, kind: input, shape index: {}]
  %s2 = inlined_call_operand.vmem [shape: f32[6,8], index: 2, kind: input, shape index: {}]
  %s3 = inlined_call_operand.vmem [shape: f32[6,1], index: 3, kind: input, shape index: {}]
  %s4 = inlined_call_operand.vmem [shape: f32[6,256], index: 4, kind: output, shape index: {}]
  %s5 = sld [smem:[#allocation0]]
  $region26: #{to_rgb_block_forward.1} parent=0
    _
  %s7 = ssub.s32 1, %s5
  %s8 = scalar_select 0, %s7, %s5
  // Predicated region
  $region2: #{to_rgb_block_forward.1} parent=0 // pred_check
    _
  $region3: #{to_rgb_block_forward.1} parent=0 // pred_check_branch
    %10 = sbr.rel (0) target = $region5
  $region4: #{to_rgb_block_forward.1} parent=0 // pred_region
    _
  $region5: #{to_rgb_block_forward.1} parent=0 // pred_fallthru
    _
  // Predicated region
  $region6: #{to_rgb_block_forward.1} parent=0 // pred_check
    _
  $region7: #{to_rgb_block_forward.1} parent=0 // pred_check_branch
    %12 = sbr.rel (0) target = $region9
  $region8: #{to_rgb_block_forward.1} parent=0 // pred_region
    _
  $region9: #{to_rgb_block_forward.1} parent=0 // pred_fallthru
    _
  // Predicated region
  $region10: #{to_rgb_block_forward.1} parent=0 // pred_check
    _
  $region11: #{to_rgb_block_forward.1} parent=0 // pred_check_branch
    %14 = sbr.rel (0) target = $region13
  $region12: #{to_rgb_block_forward.1} parent=0 // pred_region
    _
  $region13: #{to_rgb_block_forward.1} parent=0 // pred_fallthru
    _
  // Predicated region
  $region14: #{to_rgb_block_forward.1} parent=0 // pred_check
    _
  $region15: #{to_rgb_block_forward.1} parent=0 // pred_check_branch
    %16 = sbr.rel (0) target = $region17
  $region16: #{to_rgb_block_forward.1} parent=0 // pred_region
    _
  $region17: #{to_rgb_block_forward.1} parent=0 // pred_fallthru
    _
  %v17 = vld [vmem:[%s1] sm:$0xff]
  %v18 = vld [vmem:[%s0] sm:$0xff]
  %v19 = vld [vmem:[%s0 + $0x8] sm:$0xff]
  %v20 = vld [vmem:[%s0 + $0x10] sm:$0xff]
  %v21 = vld [vmem:[%s0 + $0x18] sm:$0xff]
  %v22 = vld [vmem:[%s0 + $0x20] sm:$0xff]
  %v23 = vld [vmem:[%s0 + $0x28] sm:$0xff]
  %v24 = vld [vmem:[%s0 + $0x30] sm:$0xff]
  %v25 = vld [vmem:[%s0 + $0x38] sm:$0xff]
  %v26 = vld [vmem:[%s0 + $0x40] sm:$0xff]
  %v27 = vld [vmem:[%s0 + $0x48] sm:$0xff]
  %v28 = vld [vmem:[%s0 + $0x50] sm:$0xff]
  %v29 = vld [vmem:[%s0 + $0x58] sm:$0xff]
  %v30 = vld [vmem:[%s0 + $0x60] sm:$0xff]
  %v31 = vld [vmem:[%s0 + $0x68] sm:$0xff]
  %v32 = vld [vmem:[%s0 + $0x70] sm:$0xff]
  %v33 = vld [vmem:[%s0 + $0x78] sm:$0xff]
  %v34 = vld [vmem:[%s0 + $0x80] sm:$0xff]
  %v35 = vld [vmem:[%s0 + $0x88] sm:$0xff]
  %v36 = vld [vmem:[%s0 + $0x90] sm:$0xff]
  %v37 = vld [vmem:[%s0 + $0x98] sm:$0xff]
  %v38 = vld [vmem:[%s0 + $0xa0] sm:$0xff]
  %v39 = vld [vmem:[%s0 + $0xa8] sm:$0xff]
  %vm40 = vcmask 719872
  %v42 = vsel %vm40, %v17, 0
  %44 = vmatpush.msra.mxu0 0.0
  %45 = vmatpush.msra.mxu0 0.0
  %46 = vmatpush.msra.mxu0 0.0
  %47 = vmatpush.msra.mxu0 0.0
  %48 = vmatpush.msra.mxu0 0.0
  %49 = vmatpush.msra.mxu0 %v38
  %50 = vmatpush.msra.mxu0 %v36
  %51 = vmatpush.msra.mxu0 %v34
  %52 = vmatpush.msra.mxu0 %v32
  %53 = vmatpush.msra.mxu0 %v30
  %54 = vmatpush.msra.mxu0 %v28
  %55 = vmatpush.msra.mxu0 %v26
  %56 = vmatpush.msra.mxu0 %v24
  %57 = vmatpush.msra.mxu0 %v22
  %58 = vmatpush.msra.mxu0 %v20
  %59 = vmatpush.msra.mxu0 %v18
  %60 = vmatmul.f32.gmra.mxu0 %v42
  %v61 = vpop.f32.mrf.mxu0
  %v62 = vadd.f32 0.0, %v61
  %63 = vdwg.mxu0
  %64 = vmatpush.msra.mxu0 0.0
  %65 = vmatpush.msra.mxu0 0.0
  %66 = vmatpush.msra.mxu0 0.0
  %67 = vmatpush.msra.mxu0 0.0
  %68 = vmatpush.msra.mxu0 0.0
  %69 = vmatpush.msra.mxu0 %v39
  %70 = vmatpush.msra.mxu0 %v37
  %71 = vmatpush.msra.mxu0 %v35
  %72 = vmatpush.msra.mxu0 %v33
  %73 = vmatpush.msra.mxu0 %v31
  %74 = vmatpush.msra.mxu0 %v29
  %75 = vmatpush.msra.mxu0 %v27
  %76 = vmatpush.msra.mxu0 %v25
  %77 = vmatpush.msra.mxu0 %v23
  %78 = vmatpush.msra.mxu0 %v21
  %79 = vmatpush.msra.mxu0 %v19
  %80 = vmatmul.f32.gmra.mxu0 %v42
  %v81 = vpop.f32.mrf.mxu0
  %v82 = vadd.f32 0.0, %v81
  %83 = vdwg.mxu0
  %v84 = vmax.f32 %v62, 0.0
  %v85 = vmax.f32 %v82, 0.0
  %v86 = vmul.f32 %v84, 1.4142135
  %v87 = vmul.f32 %v85, 1.4142135
  %v88 = vld [vmem:[%s2] sm:$0x3f]
  %v89 = vld [vmem:[%s3] sm:$0x3f]
  %91 = vset.pattern.permute.xlu0 0
  %92 = vperm.xlu0 %91, %v89
  %v93 = vpop.permute.xlu0 %92
  %vm95 = vcmask 64512
  %v97 = vsel %vm95, %v88, 0
  %99 = vmatpush.msra.mxu0 0.0
  %100 = vmatpush.msra.mxu0 0.0
  %101 = vmatpush.msra.mxu0 0.0
  %102 = vmatpush.msra.mxu0 0.0
  %103 = vmatpush.msra.mxu0 0.0
  %104 = vmatpush.msra.mxu0 0.0
  %105 = vmatpush.msra.mxu0 0.0
  %106 = vmatpush.msra.mxu0 0.0
  %107 = vmatpush.msra.mxu0 0.0
  %108 = vmatpush.msra.mxu0 0.0
  %109 = vmatpush.msra.mxu0 0.0
  %110 = vmatpush.msra.mxu0 0.0
  %111 = vmatpush.msra.mxu0 0.0
  %112 = vmatpush.msra.mxu0 0.0
  %113 = vmatpush.msra.mxu0 0.0
  %114 = vmatpush.msra.mxu0 %v86
  %115 = vmatmul.f32.gmra.mxu0 %v97
  %v116 = vpop.f32.mrf.mxu0
  %v117 = vadd.f32 %v93, %v116
  %118 = vdwg.mxu0
  %119 = vmatpush.msra.mxu0 0.0
  %120 = vmatpush.msra.mxu0 0.0
  %121 = vmatpush.msra.mxu0 0.0
  %122 = vmatpush.msra.mxu0 0.0
  %123 = vmatpush.msra.mxu0 0.0
  %124 = vmatpush.msra.mxu0 0.0
  %125 = vmatpush.msra.mxu0 0.0
  %126 = vmatpush.msra.mxu0 0.0
  %127 = vmatpush.msra.mxu0 0.0
  %128 = vmatpush.msra.mxu0 0.0
  %129 = vmatpush.msra.mxu0 0.0
  %130 = vmatpush.msra.mxu0 0.0
  %131 = vmatpush.msra.mxu0 0.0
  %132 = vmatpush.msra.mxu0 0.0
  %133 = vmatpush.msra.mxu0 0.0
  %134 = vmatpush.msra.mxu0 %v87
  %135 = vmatmul.f32.gmra.mxu0 %v97
  %v136 = vpop.f32.mrf.mxu0
  %v137 = vadd.f32 %v93, %v136
  %138 = vdwg.mxu0
  %139 = vst [vmem:[%s4] sm:$0x3f] %v117
  %140 = vst [vmem:[%s4 + $0x8] sm:$0x3f] %v137
  // Predicated region
  $region18: #{to_rgb_block_forward.1} parent=0 // pred_check
    _
  $region19: #{to_rgb_block_forward.1} parent=0 // pred_check_branch
    %142 = sbr.rel (0) target = $region21
  $region20: #{to_rgb_block_forward.1} parent=0 // pred_region
    _
  $region21: #{to_rgb_block_forward.1} parent=0 // pred_fallthru
    _
  // Predicated region
  $region22: #{to_rgb_block_forward.1} parent=0 // pred_check
    _
  $region23: #{to_rgb_block_forward.1} parent=0 // pred_check_branch
    %144 = sbr.rel (0) target = $region25
  $region24: #{to_rgb_block_forward.1} parent=0 // pred_region
    _
  $region25: #{to_rgb_block_forward.1} parent=0 // pred_fallthru
    _

</llo_original>
